<compile_context>
chip_gen: v5e
topology: v5e:2x2
jax: 0.10.0
libtpu: 0.0.40
codegen_flags: <defaults>
</compile_context>

<pallas_src>
import math

import jax
import jax.numpy as jnp
from jax.experimental import pallas as pl
from jax.experimental.pallas import tpu as pltpu


# ---------------------------------------------------------------------------
# Kernels
# ---------------------------------------------------------------------------

def _half_split_kernel(time_ref, freqs_ref, out_ref):
    """General path: args computed once over the half width, two stores.

    time_ref : (TB, 1)    f32  timesteps for this row tile
    freqs_ref: (1, half)  f32  resident frequency table
    out_ref  : (TB, dim)
    """
    half = freqs_ref.shape[1]
    args = time_ref[...] * freqs_ref[...]                  # (TB,1)*(1,half)->(TB,half)
    out_ref[:, :half] = jnp.sin(args).astype(out_ref.dtype)
    out_ref[:, half:] = jnp.cos(args).astype(out_ref.dtype)


def _packed_kernel(time_ref, expand_ref, sel_ref, out_ref):
    """Small-dim path: k batch rows packed per lane-dense output row.

    time_ref  : (TB, k)       f32  k timesteps per packed output row
    expand_ref: (k, k*dim)    f32  row j = [0 .. freqs|freqs .. 0] (block-diag)
    sel_ref   : (1, k*dim)    f32  1.0 on sin lanes, 0.0 on cos lanes
    out_ref   : (TB, k*dim)
    """
    k = expand_ref.shape[0]
    t = time_ref[...]
    e = expand_ref[...]
    # Exact f32 lane expansion: args[r, l] = time[k*r + l//dim] * freqs_full[l % dim].
    # (Each lane gets exactly one nonzero product; adding exact zeros preserves
    #  the same rounding as the reference's single multiply.)
    args = t[:, 0:1] * e[0:1, :]
    for j in range(1, k):
        args = args + t[:, j:j + 1] * e[j:j + 1, :]
    use_sin = sel_ref[...] > 0.5
    out_ref[...] = jnp.where(use_sin, jnp.sin(args), jnp.cos(args)).astype(out_ref.dtype)


# ---------------------------------------------------------------------------
# Wrapper
# ---------------------------------------------------------------------------

def _round_up(x: int, m: int) -> int:
    return -(-x // m) * m


def _choose_row_tile(rows: int, row_width: int, *, target_bytes: int = 2 << 20) -> int:
    """Rows per grid step.

    ~2 MiB of f32 output per tile (amortizes per-step overhead; double-buffered
    it fits v5e's 16 MiB and v7x's 32 MiB default scoped VMEM), a multiple of 8,
    and at least 2 grid steps when rows >= 16 so the "parallel" batch axis can
    split across both v7x TensorCores.
    """
    if rows < 16:
        return rows                       # one block; block dim == array dim is legal
    tb = max(8, (target_bytes // (4 * row_width)) // 8 * 8)
    tb = min(tb, _round_up((rows + 1) // 2, 8))      # guarantee >= 2 grid steps
    return min(tb, rows)


def sinusoidal_position_embeddings(time: jax.Array, dim: int,
                                   *, out_dtype=jnp.float32) -> jax.Array:
    """Pallas TPU sinusoidal timestep embeddings. time: (B,); returns (B, dim)."""
    assert dim % 2 == 0 and dim >= 4, "dim must be even and >= 4"
    half = dim // 2
    b = int(time.shape[0])

    # Hoisted frequency table (same XLA exp as the reference -> identical freqs).
    scale = math.log(10000.0) / (half - 1)
    freqs = jnp.exp(jnp.arange(half, dtype=jnp.float32) * -scale)        # (half,)

    time_f32 = time.astype(jnp.float32)

    # ---- small-dim path: lane-dense row packing ------------------------------
    k = 128 // math.gcd(dim, 128)            # smallest k with (k*dim) % 128 == 0
    use_packed = (dim < 128) and (2 <= k <= 16) and (b >= k) and (b % k == 0)

    if use_packed:
        rows, width = b // k, k * dim
        freqs_full = jnp.concatenate([freqs, freqs])                          # (dim,)
        expand = (jnp.eye(k, dtype=jnp.float32)[:, :, None]
                  * freqs_full[None, None, :]).reshape(k, width)              # (k, k*dim)
        sel = jnp.tile(jnp.concatenate([jnp.ones((half,), jnp.float32),
                                        jnp.zeros((half,), jnp.float32)]),
                       k)[None, :]                                            # (1, k*dim)
        t_packed = time_f32.reshape(rows, k)

        tb = _choose_row_tile(rows, width)
        out = pl.pallas_call(
            _packed_kernel,
            out_shape=jax.ShapeDtypeStruct((rows, width), out_dtype),
            grid=(pl.cdiv(rows, tb),),
            in_specs=[
                pl.BlockSpec((tb, k), lambda i: (i, 0)),        # packed timesteps
                pl.BlockSpec((k, width), lambda i: (0, 0)),     # block-diag freqs (resident)
                pl.BlockSpec((1, width), lambda i: (0, 0)),     # sin/cos lane select (resident)
            ],
            out_specs=pl.BlockSpec((tb, width), lambda i: (i, 0)),
            compiler_params=pltpu.CompilerParams(
                dimension_semantics=("parallel",)),
        )(t_packed, expand, sel)
        # Same row-major bytes -> free reshape, no extra HBM copy.
        return out.reshape(b, dim)

    # ---- general path: half-width args, sin/cos each computed once ----------
    rows = b
    tb = _choose_row_tile(rows, dim)
    time_2d = time_f32.reshape(b, 1)
    out = pl.pallas_call(
        _half_split_kernel,
        out_shape=jax.ShapeDtypeStruct((b, dim), out_dtype),
        # Ragged last block is handled by Pallas (OOB writes dropped), so no
        # input padding and no wrapper-side out[:b] copy.
        grid=(pl.cdiv(rows, tb),),
        in_specs=[
            pl.BlockSpec((tb, 1), lambda i: (i, 0)),            # time tile
            pl.BlockSpec((1, half), lambda i: (0, 0)),          # freqs (resident)
        ],
        out_specs=pl.BlockSpec((tb, dim), lambda i: (i, 0)),
        compiler_params=pltpu.CompilerParams(
            dimension_semantics=("parallel",)),
    )(time_2d, freqs.reshape(1, half))
    return out


# ---------------------------------------------------------------------------
# Reference + self-test
# ---------------------------------------------------------------------------

def _reference(time: jax.Array, dim: int) -> jax.Array:
    """Pure-JAX reference mirroring the PyTorch forward."""
    half = dim // 2
    scale = math.log(10000.0) / (half - 1)
    freqs = jnp.exp(jnp.arange(half, dtype=jnp.float32) * -scale)
    args = time.astype(jnp.float32)[:, None] * freqs[None, :]
    return jnp.concatenate([jnp.sin(args), jnp.cos(args)], axis=-1)


if __name__ == "__main__":
    key = jax.random.PRNGKey(0)
    batch = 8

    # Deterministic diffusion-style timesteps in [0, 1000).
    time = jax.random.randint(key, (batch,), 0, 1000).astype(jnp.float32)

    # Primary case from the module usage: small dim -> packed lane-dense path.
    dim = 32
    out = sinusoidal_position_embeddings(time, dim)
    out = jax.block_until_ready(out)
    ref = _reference(time, dim)
    assert out.shape == (batch, dim)
    assert out.dtype == jnp.float32
    max_err = jnp.max(jnp.abs(out - ref))
    # Tolerance covers only transcendental-implementation differences between
    # Mosaic and XLA sin/cos for arguments up to ~1000 (the args are identical).
    assert jnp.allclose(out, ref, atol=1e-3, rtol=1e-3), (
        f"packed path mismatch vs reference, max abs err = {max_err}")

    # Secondary check: larger dim -> half-split path (aligned half-width stores).
    dim2 = 256
    out2 = jax.block_until_ready(sinusoidal_position_embeddings(time, dim2))
    ref2 = _reference(time, dim2)
    max_err2 = jnp.max(jnp.abs(out2 - ref2))
    assert jnp.allclose(out2, ref2, atol=1e-3, rtol=1e-3), (
        f"half-split path mismatch vs reference, max abs err = {max_err2}")

    print("KERNEL_OK")
</pallas_src>

<mosaic_0001>
module attributes {stable_mosaic.version = 11 : i64} {
  func.func @_packed_kernel(%arg0: i32, %arg1: memref<2x4xf32, #tpu.memory_space<vmem>>, %arg2: memref<4x128xf32, #tpu.memory_space<vmem>>, %arg3: memref<1x128xf32, #tpu.memory_space<vmem>>, %arg4: memref<2x128xf32, #tpu.memory_space<vmem>>) attributes {dimension_semantics = [#tpu.dimension_semantics<parallel>], iteration_bounds = array<i64: 1>, scalar_prefetch = 0 : i64, scratch_operands = 0 : i64, tpu.core_type = #tpu.core_type<tc>, window_params = [{transform_indices = @transform_0, window_bounds = array<i64: 2, 4>}, {pipeline_mode = #tpu.pipeline_mode<synchronous>, transform_indices = @transform_1, window_bounds = array<i64: 4, 128>}, {pipeline_mode = #tpu.pipeline_mode<synchronous>, transform_indices = @transform_2, window_bounds = array<i64: 1, 128>}, {transform_indices = @transform_3, window_bounds = array<i64: 2, 128>}]} {
    %c0 = arith.constant 0 : index
    %c0_0 = arith.constant 0 : index
    %0 = vector.load %arg1[%c0, %c0_0] : memref<2x4xf32, #tpu.memory_space<vmem>>, vector<2x4xf32>
    %c0_1 = arith.constant 0 : index
    %c0_2 = arith.constant 0 : index
    %1 = vector.load %arg2[%c0_1, %c0_2] : memref<4x128xf32, #tpu.memory_space<vmem>>, vector<4x128xf32>
    %2 = vector.extract_strided_slice %0 {offsets = [0, 0], sizes = [2, 1], strides = [1, 1]} : vector<2x4xf32> to vector<2x1xf32>
    %3 = vector.extract_strided_slice %1 {offsets = [0, 0], sizes = [1, 128], strides = [1, 1]} : vector<4x128xf32> to vector<1x128xf32>
    %4 = vector.broadcast %2 : vector<2x1xf32> to vector<2x128xf32>
    %5 = vector.broadcast %3 : vector<1x128xf32> to vector<2x128xf32>
    %6 = arith.mulf %4, %5 : vector<2x128xf32>
    %7 = vector.extract_strided_slice %0 {offsets = [0, 1], sizes = [2, 1], strides = [1, 1]} : vector<2x4xf32> to vector<2x1xf32>
    %8 = vector.extract_strided_slice %1 {offsets = [1, 0], sizes = [1, 128], strides = [1, 1]} : vector<4x128xf32> to vector<1x128xf32>
    %9 = vector.broadcast %7 : vector<2x1xf32> to vector<2x128xf32>
    %10 = vector.broadcast %8 : vector<1x128xf32> to vector<2x128xf32>
    %11 = arith.mulf %9, %10 : vector<2x128xf32>
    %12 = arith.addf %6, %11 : vector<2x128xf32>
    %13 = vector.extract_strided_slice %0 {offsets = [0, 2], sizes = [2, 1], strides = [1, 1]} : vector<2x4xf32> to vector<2x1xf32>
    %14 = vector.extract_strided_slice %1 {offsets = [2, 0], sizes = [1, 128], strides = [1, 1]} : vector<4x128xf32> to vector<1x128xf32>
    %15 = vector.broadcast %13 : vector<2x1xf32> to vector<2x128xf32>
    %16 = vector.broadcast %14 : vector<1x128xf32> to vector<2x128xf32>
    %17 = arith.mulf %15, %16 : vector<2x128xf32>
    %18 = arith.addf %12, %17 : vector<2x128xf32>
    %19 = vector.extract_strided_slice %0 {offsets = [0, 3], sizes = [2, 1], strides = [1, 1]} : vector<2x4xf32> to vector<2x1xf32>
    %20 = vector.extract_strided_slice %1 {offsets = [3, 0], sizes = [1, 128], strides = [1, 1]} : vector<4x128xf32> to vector<1x128xf32>
    %21 = vector.broadcast %19 : vector<2x1xf32> to vector<2x128xf32>
    %22 = vector.broadcast %20 : vector<1x128xf32> to vector<2x128xf32>
    %23 = arith.mulf %21, %22 : vector<2x128xf32>
    %24 = arith.addf %18, %23 : vector<2x128xf32>
    %c0_3 = arith.constant 0 : index
    %c0_4 = arith.constant 0 : index
    %25 = vector.load %arg3[%c0_3, %c0_4] : memref<1x128xf32, #tpu.memory_space<vmem>>, vector<1x128xf32>
    %cst = arith.constant 5.000000e-01 : f32
    %26 = vector.broadcast %cst : f32 to vector<1x128xf32>
    %27 = arith.cmpf ogt, %25, %26 : vector<1x128xf32>
    %28 = math.sin %24 : vector<2x128xf32>
    %29 = math.cos %24 : vector<2x128xf32>
    %30 = vector.shape_cast %27 : vector<1x128xi1> to vector<1x128xi1>
    %31 = vector.broadcast %30 : vector<1x128xi1> to vector<2x128xi1>
    %32 = arith.select %31, %28, %29 : vector<2x128xi1>, vector<2x128xf32>
    %c0_5 = arith.constant 0 : index
    %c0_6 = arith.constant 0 : index
    %33 = vector.load %arg4[%c0_5, %c0_6] : memref<2x128xf32, #tpu.memory_space<vmem>>, vector<2x128xf32>
    tpu.vector_store %arg4[%c0_5, %c0_6], %32 {strides = array<i32>} : memref<2x128xf32, #tpu.memory_space<vmem>>, vector<2x128xf32>,
    return
  }
  func.func @transform_0(%arg0: i32) -> (i32, i32) {
    %c0_i32 = arith.constant 0 : i32
    %c0_i32_0 = arith.constant 0 : i32
    return %arg0, %c0_i32 : i32, i32
  }
  func.func @transform_1(%arg0: i32) -> (i32, i32) {
    %c0_i32 = arith.constant 0 : i32
    %c0_i32_0 = arith.constant 0 : i32
    %c0_i32_1 = arith.constant 0 : i32
    return %c0_i32, %c0_i32_0 : i32, i32
  }
  func.func @transform_2(%arg0: i32) -> (i32, i32) {
    %c0_i32 = arith.constant 0 : i32
    %c0_i32_0 = arith.constant 0 : i32
    %c0_i32_1 = arith.constant 0 : i32
    return %c0_i32, %c0_i32_0 : i32, i32
  }
  func.func @transform_3(%arg0: i32) -> (i32, i32) {
    %c0_i32 = arith.constant 0 : i32
    %c0_i32_0 = arith.constant 0 : i32
    return %arg0, %c0_i32 : i32, i32
  }
}

</mosaic_0001>

<llo_original>
// kernel: tpu_custom_call.1
$region0: #{tpu_custom_call.1}
  #allocation0 [shape = 'u32[]', space=smem, size = 0x4, offset = 0x4, fixed_abs, tag = 'smem constant byte address 0x4 - core index']
  #allocation1 [shape = 'u32[72,128]{1,0:T(1,128)}', space=vmem, size = 0x9000, scoped, tag = 'internal scratch']
  %s0 = inlined_call_operand.hbm [shape: f32[2,4], index: 0, kind: input, shape index: {}]
  %s1 = inlined_call_operand.hbm [shape: f32[4,128], index: 1, kind: input, shape index: {}]
  %s2 = inlined_call_operand.vmem [shape: f32[1,128], index: 2, kind: input, shape index: {}]
  %s3 = inlined_call_operand.hbm [shape: f32[2,128], index: 3, kind: output, shape index: {}]
  %s4 = sld [smem:[#allocation0]]
  $region30: #{tpu_custom_call.1} parent=0
    _
  %s6 = ssub.s32 1, %s4
  %s7 = scalar_select 0, %s6, %s4
  $region1: #{tpu_custom_call.1} parent=0
    #allocation2 [shape = 'u8[1024]{0}', space=vmem, size = 0x400, scoped, tag = 'input window, operand 0, single buffered']
    #allocation3 [shape = 's32[1]{0}', space=sflag, size = 0x4, scoped, tag = 'scoped memory for tpu_custom_call.1']
    #allocation4 [shape = 's32[1]{0}', space=sflag, size = 0x4, scoped, tag = 'scoped memory for tpu_custom_call.1']
    #allocation5 [shape = 'u8[2048]{0}', space=vmem, size = 0x800, scoped, tag = 'input window, operand 1, single buffered']
    #allocation6 [shape = 's32[1]{0}', space=sflag, size = 0x4, scoped, tag = 'scoped memory for tpu_custom_call.1']
    #allocation7 [shape = 'u8[1024]{0}', space=vmem, size = 0x400, scoped, tag = 'output window, operand 0, single buffered']
    %8 = vsyncpa [#allocation3], 0
    %9 = vsyncpa [#allocation6], 0
    %10 = vsyncpa [#allocation4], 0
    // Predicated region
    $region2: #{tpu_custom_call.1} parent=1 // pred_check
      _
    $region3: #{tpu_custom_call.1} parent=1 // pred_check_branch
      %12 = sbr.rel (0) target = $region5
    $region4: #{tpu_custom_call.1} parent=1 // pred_region
      %14 = vsyncadd [#allocation3], 0
      %s16 = sshll.u32 %s0, 4
      %s17 = int_to_ptr.hbm [resolvable:$true] %s16
      %s18 = sshll.u32 [#allocation2], 4
      %s19 = int_to_ptr.vmem [resolvable:$true] %s18
      %21 = dma.hbm_to_vmem [thread:$0]  %s17, 32, %s19, [#allocation3]
    $region5: #{tpu_custom_call.1} parent=1 // pred_fallthru
      _
    // Predicated region
    $region6: #{tpu_custom_call.1} parent=1 // pred_check
      _
    $region7: #{tpu_custom_call.1} parent=1 // pred_check_branch
      %23 = sbr.rel (0) target = $region9
    $region8: #{tpu_custom_call.1} parent=1 // pred_region
      %25 = vsyncadd [#allocation6], 0
      %s27 = sshll.u32 %s1, 4
      %s28 = int_to_ptr.hbm [resolvable:$true] %s27
      %s29 = sshll.u32 [#allocation5], 4
      %s30 = int_to_ptr.vmem [resolvable:$true] %s29
      %32 = dma.hbm_to_vmem [thread:$0]  %s28, 64, %s30, [#allocation6]
    $region9: #{tpu_custom_call.1} parent=1 // pred_fallthru
      _
    // Predicated region
    $region10: #{tpu_custom_call.1} parent=1 // pred_check
      _
    $region11: #{tpu_custom_call.1} parent=1 // pred_check_branch
      %34 = sbr.rel (0) target = $region13
    $region12: #{tpu_custom_call.1} parent=1 // pred_region
      _
    $region13: #{tpu_custom_call.1} parent=1 // pred_fallthru
      _
    // Predicated region
    $region14: #{tpu_custom_call.1} parent=1 // pred_check
      _
    $region15: #{tpu_custom_call.1} parent=1 // pred_check_branch
      %36 = sbr.rel (0) target = $region17
    $region16: #{tpu_custom_call.1} parent=1 // pred_region
      %38 = dma.done [#allocation3], 32
    $region17: #{tpu_custom_call.1} parent=1 // pred_fallthru
      _
    // Predicated region
    $region18: #{tpu_custom_call.1} parent=1 // pred_check
      _
    $region19: #{tpu_custom_call.1} parent=1 // pred_check_branch
      %40 = sbr.rel (0) target = $region21
    $region20: #{tpu_custom_call.1} parent=1 // pred_region
      %42 = dma.done [#allocation6], 64
    $region21: #{tpu_custom_call.1} parent=1 // pred_fallthru
      _
    %v43 = vld [vmem:[#allocation2] sm:$0x3]
    %v44 = vld [vmem:[#allocation5] sm:$0xf]
    %46 = vset.pattern.permute.xlu0 0
    %47 = vperm.xlu0 %46, %v43
    %v48 = vpop.permute.xlu0 %47
    %v50 = vperm.slane %v44, 0
    %v51 = vmul.f32 %v48, %v50
    %52 = vset.pattern.permute.xlu0 1
    %53 = vperm.xlu0 %52, %v43
    %v54 = vpop.permute.xlu0 %53
    %v56 = vperm.slane %v44, 1
    %v57 = vmul.f32 %v54, %v56
    %v58 = vadd.f32 %v51, %v57
    %59 = vset.pattern.permute.xlu0 2
    %60 = vperm.xlu0 %59, %v43
    %v61 = vpop.permute.xlu0 %60
    %v63 = vperm.slane %v44, 2
    %v64 = vmul.f32 %v61, %v63
    %v65 = vadd.f32 %v58, %v64
    %66 = vset.pattern.permute.xlu0 3
    %67 = vperm.xlu0 %66, %v43
    %v68 = vpop.permute.xlu0 %67
    %v70 = vperm.slane %v44, 3
    %v71 = vmul.f32 %v68, %v70
    %v72 = vadd.f32 %v65, %v71
    %v73 = vld [vmem:[%s2] sm:$0x1]
    %vm74 = vcmp.gt.f32.partialorder %v73, 0.5
    %v75 = vand.u32 2147483647, %v72
    %vm76 = vcmp.le.f32.partialorder %v75, 0.7853982
    %vm77 = vcmp.lt.s32.totalorder %v72, 0
    %v78 = vand.u32 %v72, 2139095040
    %v79 = vshrl.u32 %v78, 23
    %v80 = vsub.s32 %v79, 127
    %v81 = vand.u32 2147483647, %v72
    %v82 = vand.u32 %v81, 8388607
    %v83 = vor.u32 %v82, 8388608
    %v84 = vsub.s32 0, %v83
    %v85 = vadd.s32 %v80, 1
    %vm86 = vcmp.gt.s32.totalorder %v85, 0
    %v87 = vsel %vm86, %v85, 0
    %v88 = vshrl.u32 %v87, 5
    %v89 = vand.u32 %v87, 31
    %v90 = vsub.s32 32, %v89
    %v91 = vshrl.u32 683565275, %v90
    %v92 = vshll.u32 683565275, %v89
    %v93 = vshrl.u32 2475754826, %v90
    %v94 = vor.u32 %v92, %v93
    %v95 = vshll.u32 2475754826, %v89
    %v96 = vshrl.u32 2131351028, %v90
    %v97 = vor.u32 %v95, %v96
    %v98 = vshll.u32 2131351028, %v89
    %v99 = vshrl.u32 2102212464, %v90
    %v100 = vor.u32 %v98, %v99
    %v101 = vshll.u32 2102212464, %v89
    %v102 = vshrl.u32 920167782, %v90
    %v103 = vor.u32 %v101, %v102
    %v104 = vshll.u32 920167782, %v89
    %v105 = vshrl.u32 1326507024, %v90
    %v106 = vor.u32 %v104, %v105
    %vm107 = vcmp.lt.s32.totalorder %v88, 1
    %vm108 = vcmp.lt.s32.totalorder %v88, 2
    %vm109 = vcmp.lt.s32.totalorder %v88, 3
    %vm110 = vcmp.lt.s32.totalorder %v88, 4
    %v111 = vsel %vm107, %v91, %v94
    %v112 = vsel %vm110, %v100, 2102212464
    %v113 = vsel %vm109, %v97, %v112
    %v114 = vsel %vm108, %v111, %v113
    %v115 = vsel %vm107, %v94, %v97
    %v116 = vsel %vm110, %v103, 920167782
    %v117 = vsel %vm109, %v100, %v116
    %v118 = vsel %vm108, %v115, %v117
    %v119 = vsel %vm107, %v97, %v100
    %v120 = vsel %vm110, %v106, 1326507024
    %v121 = vsel %vm109, %v103, %v120
    %v122 = vsel %vm108, %v119, %v121
    %v123 = vshll.u32 %v83, 8
    %v124 = vand.u32 %v123, 65535
    %v125 = vshrl.u32 %v123, 16
    %v126 = vand.u32 %v122, 65535
    %v127 = vshrl.u32 %v122, 16
    %v128 = vmul.u32 %v124, %v126
    %v129 = vmul.u32 %v124, %v127
    %v130 = vmul.u32 %v125, %v126
    %v131 = vmul.u32 %v125, %v127
    %v132 = vshll.u32 %v129, 16
    %v133 = vshrl.u32 %v129, 16
    %v134 = vshll.u32 %v130, 16
    %v135 = vshrl.u32 %v130, 16
    %vm136 = vc.u32 %v128, %v132
    %v137 = vsel %vm136, 1, 0
    %v138 = vadd.s32 %v128, %v132
    %v139 = vadd.s32 %v131, %v137
    %vm140 = vc.u32 %v138, %v134
    %v141 = vsel %vm140, 1, 0
    %v142 = vadd.s32 %v138, %v134
    %v143 = vadd.s32 %v139, %v141
    %v144 = vadd.s32 %v143, %v133
    %v145 = vadd.s32 %v144, %v135
    %v146 = vand.u32 %v123, 65535
    %v147 = vshrl.u32 %v123, 16
    %v148 = vand.u32 %v118, 65535
    %v149 = vshrl.u32 %v118, 16
    %v150 = vmul.u32 %v146, %v148
    %v151 = vmul.u32 %v146, %v149
    %v152 = vmul.u32 %v147, %v148
    %v153 = vmul.u32 %v147, %v149
    %v154 = vshll.u32 %v151, 16
    %v155 = vshrl.u32 %v151, 16
    %v156 = vshll.u32 %v152, 16
    %v157 = vshrl.u32 %v152, 16
    %vm158 = vc.u32 %v150, %v154
    %v159 = vsel %vm158, 1, 0
    %v160 = vadd.s32 %v150, %v154
    %v161 = vadd.s32 %v153, %v159
    %vm162 = vc.u32 %v160, %v156
    %v163 = vsel %vm162, 1, 0
    %v164 = vadd.s32 %v160, %v156
    %v165 = vadd.s32 %v161, %v163
    %v166 = vadd.s32 %v165, %v155
    %v167 = vadd.s32 %v166, %v157
    %v168 = vmul.u32 %v123, %v114
    %v169 = vadd.s32 %v145, %v164
    %vm170 = vc.u32 %v145, %v164
    %v171 = vadd.s32 %v167, 1
    %v172 = vsel %vm170, %v171, %v167
    %v173 = vadd.s32 %v168, %v172
    %v174 = vadd.s32 %v173, 536870912
    %v175 = vshrl.u32 %v174, 30
    %v176 = vshll.u32 %v175, 30
    %v177 = vsub.s32 %v173, %v176
    %vm178 = vcmp.lt.s32.totalorder %v177, 0
    %v179 = vsub.s32 0, %v177
    %v180 = vsel %vm178, %v179, %v177
    %v181 = vclz %v180
    %v182 = vsub.s32 %v181, 2
    %vm183 = vcmp.gt.s32.totalorder 0, %v182
    %v184 = vsel %vm183, 0, %v182
    %v185 = vsub.s32 32, %v184
    %v186 = vshll.u32 %v177, %v184
    %v187 = vshrl.u32 %v169, %v185
    %v188 = vor.u32 %v186, %v187
    %v189 = vsub.s32 4294967266, %v184
    %v190 = vadd.s32 %v189, 127
    %v191 = vshll.u32 %v190, 23
    %v192 = vor.u32 4788187, %v191
    %v193 = vand.u32 2147483647, %v192
    %v195 = vcvt.s32.f32 %v188
    %v196 = vmul.f32 %v195, %v193
    %v197 = vxor.u32 %v196, 2147483648
    %v198 = vsel %vm77, %v197, %v196
    %v199 = vsub.s32 4, %v175
    %v200 = vsel %vm77, %v199, %v175
    %v201 = vsel %vm76, %v72, %v198
    %v202 = vsel %vm76, 0, %v200
    %v203 = vmul.f32 %v201, %v201
    %v204 = vmul.f32 %v203, -0.001358992
    %v205 = vadd.f32 %v204, 0.041655596
    %v206 = vmul.f32 %v203, %v205
    %v207 = vadd.f32 %v206, -0.4999988
    %v208 = vmul.f32 %v203, %v207
    %v209 = vadd.f32 1.0, %v208
    %v210 = vmul.f32 %v201, %v201
    %v211 = vmul.f32 %v210, -0.00019511016
    %v212 = vadd.f32 %v211, 0.008332121
    %v213 = vmul.f32 %v210, %v212
    %v214 = vadd.f32 %v213, -0.16666654
    %v215 = vmul.f32 %v210, %v214
    %v216 = vadd.f32 %v215, 1.0
    %v217 = vmul.f32 %v216, %v201
    %vm218 = vweird.f32 %v72
    %v219 = vadd.s32 %v202, 3
    %v220 = vand.u32 %v219, 3
    %vm221 = vcmp.lt.s32.totalorder %v220, 2
    %vm222 = vcmp.eq.s32.totalorder %v220, 0
    %v223 = vxor.u32 %v217, 2147483648
    %v224 = vsel %vm222, %v209, %v223
    %vm225 = vcmp.eq.s32.totalorder %v220, 2
    %v226 = vxor.u32 %v209, 2147483648
    %v227 = vsel %vm225, %v226, %v217
    %v228 = vsel %vm221, %v224, %v227
    %v229 = vsel %vm218, nan, %v228
    %v230 = vand.u32 2147483647, %v72
    %vm231 = vcmp.le.f32.partialorder %v230, 0.7853982
    %vm232 = vcmp.lt.s32.totalorder %v72, 0
    %v233 = vand.u32 %v72, 2139095040
    %v234 = vshrl.u32 %v233, 23
    %v235 = vsub.s32 %v234, 127
    %v236 = vand.u32 2147483647, %v72
    %v237 = vand.u32 %v236, 8388607
    %v238 = vor.u32 %v237, 8388608
    %v239 = vsub.s32 0, %v238
    %v240 = vadd.s32 %v235, 1
    %vm241 = vcmp.gt.s32.totalorder %v240, 0
    %v242 = vsel %vm241, %v240, 0
    %v243 = vshrl.u32 %v242, 5
    %v244 = vand.u32 %v242, 31
    %v245 = vsub.s32 32, %v244
    %v246 = vshrl.u32 683565275, %v245
    %v247 = vshll.u32 683565275, %v244
    %v248 = vshrl.u32 2475754826, %v245
    %v249 = vor.u32 %v247, %v248
    %v250 = vshll.u32 2475754826, %v244
    %v251 = vshrl.u32 2131351028, %v245
    %v252 = vor.u32 %v250, %v251
    %v253 = vshll.u32 2131351028, %v244
    %v254 = vshrl.u32 2102212464, %v245
    %v255 = vor.u32 %v253, %v254
    %v256 = vshll.u32 2102212464, %v244
    %v257 = vshrl.u32 920167782, %v245
    %v258 = vor.u32 %v256, %v257
    %v259 = vshll.u32 920167782, %v244
    %v260 = vshrl.u32 1326507024, %v245
    %v261 = vor.u32 %v259, %v260
    %vm262 = vcmp.lt.s32.totalorder %v243, 1
    %vm263 = vcmp.lt.s32.totalorder %v243, 2
    %vm264 = vcmp.lt.s32.totalorder %v243, 3
    %vm265 = vcmp.lt.s32.totalorder %v243, 4
    %v266 = vsel %vm262, %v246, %v249
    %v267 = vsel %vm265, %v255, 2102212464
    %v268 = vsel %vm264, %v252, %v267
    %v269 = vsel %vm263, %v266, %v268
    %v270 = vsel %vm262, %v249, %v252
    %v271 = vsel %vm265, %v258, 920167782
    %v272 = vsel %vm264, %v255, %v271
    %v273 = vsel %vm263, %v270, %v272
    %v274 = vsel %vm262, %v252, %v255
    %v275 = vsel %vm265, %v261, 1326507024
    %v276 = vsel %vm264, %v258, %v275
    %v277 = vsel %vm263, %v274, %v276
    %v278 = vshll.u32 %v238, 8
    %v279 = vand.u32 %v278, 65535
    %v280 = vshrl.u32 %v278, 16
    %v281 = vand.u32 %v277, 65535
    %v282 = vshrl.u32 %v277, 16
    %v283 = vmul.u32 %v279, %v281
    %v284 = vmul.u32 %v279, %v282
    %v285 = vmul.u32 %v280, %v281
    %v286 = vmul.u32 %v280, %v282
    %v287 = vshll.u32 %v284, 16
    %v288 = vshrl.u32 %v284, 16
    %v289 = vshll.u32 %v285, 16
    %v290 = vshrl.u32 %v285, 16
    %vm291 = vc.u32 %v283, %v287
    %v292 = vsel %vm291, 1, 0
    %v293 = vadd.s32 %v283, %v287
    %v294 = vadd.s32 %v286, %v292
    %vm295 = vc.u32 %v293, %v289
    %v296 = vsel %vm295, 1, 0
    %v297 = vadd.s32 %v293, %v289
    %v298 = vadd.s32 %v294, %v296
    %v299 = vadd.s32 %v298, %v288
    %v300 = vadd.s32 %v299, %v290
    %v301 = vand.u32 %v278, 65535
    %v302 = vshrl.u32 %v278, 16
    %v303 = vand.u32 %v273, 65535
    %v304 = vshrl.u32 %v273, 16
    %v305 = vmul.u32 %v301, %v303
    %v306 = vmul.u32 %v301, %v304
    %v307 = vmul.u32 %v302, %v303
    %v308 = vmul.u32 %v302, %v304
    %v309 = vshll.u32 %v306, 16
    %v310 = vshrl.u32 %v306, 16
    %v311 = vshll.u32 %v307, 16
    %v312 = vshrl.u32 %v307, 16
    %vm313 = vc.u32 %v305, %v309
    %v314 = vsel %vm313, 1, 0
    %v315 = vadd.s32 %v305, %v309
    %v316 = vadd.s32 %v308, %v314
    %vm317 = vc.u32 %v315, %v311
    %v318 = vsel %vm317, 1, 0
    %v319 = vadd.s32 %v315, %v311
    %v320 = vadd.s32 %v316, %v318
    %v321 = vadd.s32 %v320, %v310
    %v322 = vadd.s32 %v321, %v312
    %v323 = vmul.u32 %v278, %v269
    %v324 = vadd.s32 %v300, %v319
    %vm325 = vc.u32 %v300, %v319
    %v326 = vadd.s32 %v322, 1
    %v327 = vsel %vm325, %v326, %v322
    %v328 = vadd.s32 %v323, %v327
    %v329 = vadd.s32 %v328, 536870912
    %v330 = vshrl.u32 %v329, 30
    %v331 = vshll.u32 %v330, 30
    %v332 = vsub.s32 %v328, %v331
    %vm333 = vcmp.lt.s32.totalorder %v332, 0
    %v334 = vsub.s32 0, %v332
    %v335 = vsel %vm333, %v334, %v332
    %v336 = vclz %v335
    %v337 = vsub.s32 %v336, 2
    %vm338 = vcmp.gt.s32.totalorder 0, %v337
    %v339 = vsel %vm338, 0, %v337
    %v340 = vsub.s32 32, %v339
    %v341 = vshll.u32 %v332, %v339
    %v342 = vshrl.u32 %v324, %v340
    %v343 = vor.u32 %v341, %v342
    %v344 = vsub.s32 4294967266, %v339
    %v345 = vadd.s32 %v344, 127
    %v346 = vshll.u32 %v345, 23
    %v347 = vor.u32 4788187, %v346
    %v348 = vand.u32 2147483647, %v347
    %v350 = vcvt.s32.f32 %v343
    %v351 = vmul.f32 %v350, %v348
    %v352 = vxor.u32 %v351, 2147483648
    %v353 = vsel %vm232, %v352, %v351
    %v354 = vsub.s32 4, %v330
    %v355 = vsel %vm232, %v354, %v330
    %v356 = vsel %vm231, %v72, %v353
    %v357 = vsel %vm231, 0, %v355
    %v358 = vmul.f32 %v356, %v356
    %v359 = vmul.f32 %v358, -0.001358992
    %v360 = vadd.f32 %v359, 0.041655596
    %v361 = vmul.f32 %v358, %v360
    %v362 = vadd.f32 %v361, -0.4999988
    %v363 = vmul.f32 %v358, %v362
    %v364 = vadd.f32 1.0, %v363
    %v365 = vmul.f32 %v356, %v356
    %v366 = vmul.f32 %v365, -0.00019511016
    %v367 = vadd.f32 %v366, 0.008332121
    %v368 = vmul.f32 %v365, %v367
    %v369 = vadd.f32 %v368, -0.16666654
    %v370 = vmul.f32 %v365, %v369
    %v371 = vadd.f32 %v370, 1.0
    %v372 = vmul.f32 %v371, %v356
    %vm373 = vweird.f32 %v72
    %v374 = vand.u32 %v357, 3
    %vm375 = vcmp.lt.s32.totalorder %v374, 2
    %vm376 = vcmp.eq.s32.totalorder %v374, 0
    %v377 = vxor.u32 %v372, 2147483648
    %v378 = vsel %vm376, %v364, %v377
    %vm379 = vcmp.eq.s32.totalorder %v374, 2
    %v380 = vxor.u32 %v364, 2147483648
    %v381 = vsel %vm379, %v380, %v372
    %v382 = vsel %vm375, %v378, %v381
    %v383 = vsel %vm373, nan, %v382
    %v384 = vsel %vm74, 1, 0
    %v385 = vperm.slane %v384, 0
    %vm386 = vcmp.eq.s32.totalorder %v385, 1
    %v387 = vsel %vm386, %v229, %v383
    %388 = vst [vmem:[#allocation7] sm:$0x3] %v387
    // Predicated region
    $region22: #{tpu_custom_call.1} parent=1 // pred_check
      _
    $region23: #{tpu_custom_call.1} parent=1 // pred_check_branch
      %390 = sbr.rel (0) target = $region25
    $region24: #{tpu_custom_call.1} parent=1 // pred_region
      %392 = vsyncadd [#allocation4], 0
      %s394 = sshll.u32 [#allocation7], 4
      %s395 = int_to_ptr.vmem [resolvable:$true] %s394
      %s396 = sshll.u32 %s3, 4
      %s397 = int_to_ptr.hbm [resolvable:$true] %s396
      %399 = dma.vmem_to_hbm [thread:$0]  %s395, 32, %s397, [#allocation4]
    $region25: #{tpu_custom_call.1} parent=1 // pred_fallthru
      _
    // Predicated region
    $region26: #{tpu_custom_call.1} parent=1 // pred_check
      _
    $region27: #{tpu_custom_call.1} parent=1 // pred_check_branch
      %401 = sbr.rel (0) target = $region29
    $region28: #{tpu_custom_call.1} parent=1 // pred_region
      %403 = dma.done [#allocation4], 32
    $region29: #{tpu_custom_call.1} parent=1 // pred_fallthru
      _
    %404 = vsyncpa [#allocation3], 1
    %405 = vsyncpa [#allocation6], 1
    %406 = vsyncpa [#allocation4], 1

</llo_original>
